<compile_context>
chip_gen: v6e
topology: v6e:2x2x1
jax: 0.10.0
libtpu: 0.0.40
codegen_flags: <defaults>
</compile_context>

<pallas_src>
import functools
import math

import jax
import jax.numpy as jnp
from jax.experimental import pallas as pl
from jax.experimental.pallas import tpu as pltpu


def _upconv_kernel(xw_ref, w_ref, o_ref, *, n, tile_l, c_out,
                   last_tile, last_col, mxu_dtype):
    """One grid step = one lane-dense output tile.

    xw_ref: (1, C_in, (tile_l+2)*N)  edge-padded input window for this tile,
            column index = (local_padded_pos)*N + batch.
    w_ref : (8*C_out, C_in) row-blocks:
            [0:2C)   tap0 (even;odd), [2C:4C) tap1, [4C:6C) tap2,
            [6C:7C)  0.25*w0 (left reflect correction),
            [7C:8C)  0.25*w2 (right reflect correction).
    o_ref : (2*C_out, tile_l*N)  rows [0,C_out)=even outputs, [C_out,2C_out)=odd.
    """
    tile_cols = tile_l * n
    xw = xw_ref[0]                                   # (C_in, (tile_l+2)*N), f32
    xw_mx = xw.astype(mxu_dtype)

    # Per-tap accumulated matmuls (upsample taps + conv + edge pad folded into
    # the weights) -- no im2col temporary, identical MXU FLOPs.
    def tap(t):
        wt = w_ref[2 * c_out * t:2 * c_out * (t + 1), :].astype(mxu_dtype)
        return jnp.dot(wt, xw_mx[:, t * n:t * n + tile_cols],
                       preferred_element_type=jnp.float32)

    y = tap(0) + tap(1) + tap(2)                     # (2*C_out, tile_cols) f32
    o_ref[...] = y.astype(o_ref.dtype)

    # Reflect-pad corrections (edge pad is exact except at the first even and
    # last odd output column); applied as in-place slice adds on o_ref.
    @pl.when(pl.program_id(0) == 0)
    def _():
        # y_even[:, col 0] += 0.25*w0 @ (x[1] - x[0])
        d = xw[:, 2 * n:3 * n] - xw[:, 1 * n:2 * n]                  # (C_in, N)
        corr = jnp.dot(w_ref[6 * c_out:7 * c_out, :], d,
                       preferred_element_type=jnp.float32)
        o_ref[0:c_out, 0:n] = o_ref[0:c_out, 0:n] + corr.astype(o_ref.dtype)

    @pl.when(pl.program_id(0) == last_tile)
    def _():
        # y_odd[:, col L-1] += 0.25*w2 @ (x[L-2] - x[L-1])
        j = last_col
        d = (xw[:, j * n:(j + 1) * n]
             - xw[:, (j + 1) * n:(j + 2) * n])                       # (C_in, N)
        corr = jnp.dot(w_ref[7 * c_out:8 * c_out, :], d,
                       preferred_element_type=jnp.float32)
        o_ref[c_out:2 * c_out, j * n:(j + 1) * n] = (
            o_ref[c_out:2 * c_out, j * n:(j + 1) * n] + corr.astype(o_ref.dtype))


def _choose_tiling(l, n):
    """Pick tile_l so tile_l*n is a multiple of 128 (unmasked lane-dense stores)
    and each tile is ~<=1024 columns (pipeline-friendly, VMEM-safe on v7x)."""
    step = 128 // math.gcd(n, 128)         # smallest tile_l with tile_l*n % 128 == 0
    max_cols = 1024
    if l * n <= max_cols:
        tile_l = ((l + step - 1) // step) * step
        return tile_l, 1
    tile_l = max(step, ((max_cols // n) // step) * step)
    num_tiles = (l + tile_l - 1) // tile_l
    return tile_l, num_tiles


def up_conv(x, w, *, mxu_dtype=None):
    """x: (N, C_in, L) f32, w: (C_out, C_in, 3) f32 -> (N, C_out, 2L) f32.

    mxu_dtype: optional matmul-input dtype (e.g. jnp.bfloat16 on v6e/v7x for
    production channel counts); None keeps the exact f32 path.
    """
    n, c_in, l = x.shape
    c_out, c_in_w, k = w.shape
    assert c_in_w == c_in and k == 3
    assert l >= 2, "fused UpConv kernel requires L >= 2"
    if mxu_dtype is None:
        mxu_dtype = x.dtype

    tile_l, num_tiles = _choose_tiling(l, n)
    l_pad = tile_l * num_tiles
    win_cols = (tile_l + 2) * n
    tile_cols = tile_l * n
    last_tile = (l - 1) // tile_l
    last_col = (l - 1) % tile_l

    # --- fold upsample(x2, linear, align_corners=False) + conv taps + reflect
    #     corrections into one 2-D weight tensor (8*C_out, C_in) -------------
    w0, w1, w2 = w[:, :, 0], w[:, :, 1], w[:, :, 2]
    e0, e1, e2 = 0.75 * w0 + 0.25 * w1, 0.25 * w0 + 0.75 * w1 + 0.75 * w2, 0.25 * w2
    o0, o1, o2 = 0.25 * w0, 0.75 * w0 + 0.75 * w1 + 0.25 * w2, 0.25 * w1 + 0.75 * w2
    w_all = jnp.concatenate(
        [e0, o0, e1, o1, e2, o2, 0.25 * w0, 0.25 * w2], axis=0)     # (8*C_out, C_in)

    # --- edge-pad x (reproduces the upsample's index clamping exactly), fold
    #     batch into the lane axis, and build per-tile windows with a 2-column
    #     halo so grid tiles are non-overlapping and fully pipelined ---------
    x_pad = jnp.pad(x, ((0, 0), (0, 0), (1, 1 + l_pad - l)), mode="edge")
    xt = jnp.transpose(x_pad, (1, 2, 0))                            # (C_in, l_pad+2, N)
    x_win = jnp.stack(
        [xt[:, i * tile_l:i * tile_l + tile_l + 2, :].reshape(c_in, win_cols)
         for i in range(num_tiles)], axis=0)                        # (T, C_in, win_cols)

    # VMEM budget: double-buffered in/out tiles + weights + f32 accumulator.
    est = 4 * (2 * (c_in * win_cols + 2 * c_out * tile_cols)
               + 8 * c_out * c_in + 4 * 2 * c_out * tile_cols)
    vmem_limit = int(min(48 << 20, max(32 << 20, 4 * est)))

    kern = functools.partial(
        _upconv_kernel, n=n, tile_l=tile_l, c_out=c_out,
        last_tile=last_tile, last_col=last_col, mxu_dtype=mxu_dtype)

    out = pl.pallas_call(
        kern,
        out_shape=jax.ShapeDtypeStruct((2 * c_out, l_pad * n), x.dtype),
        grid=(num_tiles,),
        in_specs=[
            pl.BlockSpec((1, c_in, win_cols), lambda i: (i, 0, 0)),
            pl.BlockSpec((8 * c_out, c_in), lambda i: (0, 0)),
        ],
        out_specs=pl.BlockSpec((2 * c_out, tile_cols), lambda i: (0, i)),
        compiler_params=pltpu.CompilerParams(
            dimension_semantics=("parallel",),
            vmem_limit_bytes=vmem_limit),
    )(x_win, w_all)

    # Un-fold layout outside the kernel (pure plumbing; a consumer that accepts
    # the (2, C_out, L, N) layout could skip this transpose entirely).
    out = out[:, :l * n].reshape(2, c_out, l, n)
    return jnp.transpose(out, (3, 1, 2, 0)).reshape(n, c_out, 2 * l)


def _ref_upconv(x, w):
    """Pure-JAX reference reproducing PyTorch Upsample(linear)+Conv1d(reflect)."""
    N, C, L = x.shape
    x_prev = jnp.concatenate([x[:, :, :1], x[:, :, :-1]], axis=2)
    x_next = jnp.concatenate([x[:, :, 1:], x[:, :, -1:]], axis=2)
    even = 0.25 * x_prev + 0.75 * x
    odd = 0.75 * x + 0.25 * x_next
    u = jnp.stack([even, odd], axis=-1).reshape(N, C, 2 * L)
    u_pad = jnp.pad(u, ((0, 0), (0, 0), (1, 1)), mode="reflect")
    return jax.lax.conv_general_dilated(
        u_pad, w, window_strides=(1,), padding="VALID",
        dimension_numbers=("NCH", "OIH", "NCH"))


if __name__ == "__main__":
    # Small shapes consistent with the module: batch=2, in_channels=4,
    # out_channels=8, length=16, kernel_size=3.
    N, C_IN, C_OUT, L, K = 2, 4, 8, 16, 3

    key = jax.random.PRNGKey(0)
    kx, kw = jax.random.split(key)
    x = jax.random.normal(kx, (N, C_IN, L), dtype=jnp.float32)
    w = jax.random.normal(kw, (C_OUT, C_IN, K), dtype=jnp.float32) * 0.1

    out = jax.jit(up_conv)(x, w)
    jax.block_until_ready(out)

    ref = _ref_upconv(x, w)
    assert out.shape == (N, C_OUT, 2 * L), out.shape
    assert jnp.allclose(out, ref, atol=1e-5, rtol=1e-5), float(
        jnp.max(jnp.abs(out - ref)))

    print("KERNEL_OK")
</pallas_src>

<mosaic_0001>
module attributes {stable_mosaic.version = 11 : i64} {
  func.func @_upconv_kernel(%arg0: i32, %arg1: memref<1x4x132xf32, #tpu.memory_space<vmem>>, %arg2: memref<64x4xf32, #tpu.memory_space<vmem>>, %arg3: memref<16x128xf32, #tpu.memory_space<vmem>>) attributes {dimension_semantics = [#tpu.dimension_semantics<parallel>], iteration_bounds = array<i64: 1>, scalar_prefetch = 0 : i64, scratch_operands = 0 : i64, tpu.core_type = #tpu.core_type<tc>, window_params = [{transform_indices = @transform_0, window_bounds = array<i64: 1, 4, 132>}, {pipeline_mode = #tpu.pipeline_mode<synchronous>, transform_indices = @transform_1, window_bounds = array<i64: 64, 4>}, {transform_indices = @transform_2, window_bounds = array<i64: 16, 128>}]} {
    %c0 = arith.constant 0 : index
    %c0_0 = arith.constant 0 : index
    %c0_1 = arith.constant 0 : index
    %0 = vector.load %arg1[%c0, %c0_0, %c0_1] : memref<1x4x132xf32, #tpu.memory_space<vmem>>, vector<1x4x132xf32>
    %1 = vector.shape_cast %0 : vector<1x4x132xf32> to vector<4x132xf32>
    %c0_2 = arith.constant 0 : index
    %c0_3 = arith.constant 0 : index
    %2 = vector.load %arg2[%c0_2, %c0_3] : memref<64x4xf32, #tpu.memory_space<vmem>>, vector<16x4xf32>
    %3 = vector.extract_strided_slice %1 {offsets = [0, 0], sizes = [4, 128], strides = [1, 1]} : vector<4x132xf32> to vector<4x128xf32>
    %cst = arith.constant dense<0.000000e+00> : vector<16x128xf32>
    %4 = tpu.matmul %2, %3, %cst {dimension_numbers = #tpu.dot_dimension_numbers<[1], [0], [0], [1], [0, 0, 1, 1], [], []>} : vector<16x4xf32>, vector<4x128xf32>, vector<16x128xf32> -> vector<16x128xf32>
    %c16 = arith.constant 16 : index
    %c0_4 = arith.constant 0 : index
    %5 = vector.load %arg2[%c16, %c0_4] : memref<64x4xf32, #tpu.memory_space<vmem>>, vector<16x4xf32>
    %6 = vector.extract_strided_slice %1 {offsets = [0, 2], sizes = [4, 128], strides = [1, 1]} : vector<4x132xf32> to vector<4x128xf32>
    %cst_5 = arith.constant dense<0.000000e+00> : vector<16x128xf32>
    %7 = tpu.matmul %5, %6, %cst_5 {dimension_numbers = #tpu.dot_dimension_numbers<[1], [0], [0], [1], [0, 0, 1, 1], [], []>} : vector<16x4xf32>, vector<4x128xf32>, vector<16x128xf32> -> vector<16x128xf32>
    %8 = arith.addf %4, %7 : vector<16x128xf32>
    %c32 = arith.constant 32 : index
    %c0_6 = arith.constant 0 : index
    %9 = vector.load %arg2[%c32, %c0_6] : memref<64x4xf32, #tpu.memory_space<vmem>>, vector<16x4xf32>
    %10 = vector.extract_strided_slice %1 {offsets = [0, 4], sizes = [4, 128], strides = [1, 1]} : vector<4x132xf32> to vector<4x128xf32>
    %cst_7 = arith.constant dense<0.000000e+00> : vector<16x128xf32>
    %11 = tpu.matmul %9, %10, %cst_7 {dimension_numbers = #tpu.dot_dimension_numbers<[1], [0], [0], [1], [0, 0, 1, 1], [], []>} : vector<16x4xf32>, vector<4x128xf32>, vector<16x128xf32> -> vector<16x128xf32>
    %12 = arith.addf %8, %11 : vector<16x128xf32>
    %c0_8 = arith.constant 0 : index
    %c0_9 = arith.constant 0 : index
    %13 = vector.load %arg3[%c0_8, %c0_9] : memref<16x128xf32, #tpu.memory_space<vmem>>, vector<16x128xf32>
    tpu.vector_store %arg3[%c0_8, %c0_9], %12 {strides = array<i32>} : memref<16x128xf32, #tpu.memory_space<vmem>>, vector<16x128xf32>,
    %c0_i32 = arith.constant 0 : i32
    %14 = arith.cmpi eq, %arg0, %c0_i32 : i32
    %15 = arith.extui %14 : i1 to i32
    %c0_i32_10 = arith.constant 0 : i32
    %16 = arith.cmpi ne, %15, %c0_i32_10 : i32
    scf.if %16 {
      %20 = vector.extract_strided_slice %1 {offsets = [0, 4], sizes = [4, 2], strides = [1, 1]} : vector<4x132xf32> to vector<4x2xf32>
      %21 = vector.extract_strided_slice %1 {offsets = [0, 2], sizes = [4, 2], strides = [1, 1]} : vector<4x132xf32> to vector<4x2xf32>
      %22 = arith.subf %20, %21 : vector<4x2xf32>
      %c48 = arith.constant 48 : index
      %c0_13 = arith.constant 0 : index
      %23 = vector.load %arg2[%c48, %c0_13] : memref<64x4xf32, #tpu.memory_space<vmem>>, vector<8x4xf32>
      %cst_14 = arith.constant dense<0.000000e+00> : vector<8x2xf32>
      %24 = tpu.matmul %23, %22, %cst_14 {dimension_numbers = #tpu.dot_dimension_numbers<[1], [0], [0], [1], [0, 0, 1, 1], [], []>} : vector<8x4xf32>, vector<4x2xf32>, vector<8x2xf32> -> vector<8x2xf32>
      %c0_15 = arith.constant 0 : index
      %c0_16 = arith.constant 0 : index
      %25 = vector.load %arg3[%c0_15, %c0_16] : memref<16x128xf32, #tpu.memory_space<vmem>>, vector<8x2xf32>
      %26 = arith.addf %25, %24 : vector<8x2xf32>
      %c0_17 = arith.constant 0 : index
      %c0_18 = arith.constant 0 : index
      %27 = vector.load %arg3[%c0_17, %c0_18] : memref<16x128xf32, #tpu.memory_space<vmem>>, vector<8x2xf32>
      tpu.vector_store %arg3[%c0_17, %c0_18], %26 {strides = array<i32>} : memref<16x128xf32, #tpu.memory_space<vmem>>, vector<8x2xf32>,
    } else {
    }
    %c0_i32_11 = arith.constant 0 : i32
    %17 = arith.cmpi eq, %arg0, %c0_i32_11 : i32
    %18 = arith.extui %17 : i1 to i32
    %c0_i32_12 = arith.constant 0 : i32
    %19 = arith.cmpi ne, %18, %c0_i32_12 : i32
    scf.if %19 {
      %20 = vector.extract_strided_slice %1 {offsets = [0, 30], sizes = [4, 2], strides = [1, 1]} : vector<4x132xf32> to vector<4x2xf32>
      %21 = vector.extract_strided_slice %1 {offsets = [0, 32], sizes = [4, 2], strides = [1, 1]} : vector<4x132xf32> to vector<4x2xf32>
      %22 = arith.subf %20, %21 : vector<4x2xf32>
      %c56 = arith.constant 56 : index
      %c0_13 = arith.constant 0 : index
      %23 = vector.load %arg2[%c56, %c0_13] : memref<64x4xf32, #tpu.memory_space<vmem>>, vector<8x4xf32>
      %cst_14 = arith.constant dense<0.000000e+00> : vector<8x2xf32>
      %24 = tpu.matmul %23, %22, %cst_14 {dimension_numbers = #tpu.dot_dimension_numbers<[1], [0], [0], [1], [0, 0, 1, 1], [], []>} : vector<8x4xf32>, vector<4x2xf32>, vector<8x2xf32> -> vector<8x2xf32>
      %c8 = arith.constant 8 : index
      %c30 = arith.constant 30 : index
      %25 = vector.load %arg3[%c8, %c30] : memref<16x128xf32, #tpu.memory_space<vmem>>, vector<8x2xf32>
      %26 = arith.addf %25, %24 : vector<8x2xf32>
      %c8_15 = arith.constant 8 : index
      %c30_16 = arith.constant 30 : index
      %27 = vector.load %arg3[%c8_15, %c30_16] : memref<16x128xf32, #tpu.memory_space<vmem>>, vector<8x2xf32>
      tpu.vector_store %arg3[%c8_15, %c30_16], %26 {strides = array<i32>} : memref<16x128xf32, #tpu.memory_space<vmem>>, vector<8x2xf32>,
    } else {
    }
    return
  }
  func.func @transform_0(%arg0: i32) -> (i32, i32, i32) {
    %c0_i32 = arith.constant 0 : i32
    %c0_i32_0 = arith.constant 0 : i32
    %c0_i32_1 = arith.constant 0 : i32
    return %arg0, %c0_i32, %c0_i32_0 : i32, i32, i32
  }
  func.func @transform_1(%arg0: i32) -> (i32, i32) {
    %c0_i32 = arith.constant 0 : i32
    %c0_i32_0 = arith.constant 0 : i32
    %c0_i32_1 = arith.constant 0 : i32
    return %c0_i32, %c0_i32_0 : i32, i32
  }
  func.func @transform_2(%arg0: i32) -> (i32, i32) {
    %c0_i32 = arith.constant 0 : i32
    %c0_i32_0 = arith.constant 0 : i32
    return %c0_i32, %arg0 : i32, i32
  }
}

</mosaic_0001>

<llo_original>
// kernel: up_conv.1
$region0: #{up_conv.1}
  #allocation0 [shape = 'u32[]', space=smem, size = 0x4, offset = 0x4, fixed_abs, tag = 'smem constant byte address 0x4 - core index']
  #allocation1 [shape = 'u32[144,128]{1,0:T(1,128)}', space=vmem, size = 0x12000, scoped, tag = 'internal scratch']
  %s0 = inlined_call_operand.vmem [shape: f32[1,4,132], index: 0, kind: input, shape index: {}]
  %s1 = inlined_call_operand.vmem [shape: f32[64,4], index: 1, kind: input, shape index: {}]
  %s2 = inlined_call_operand.vmem [shape: f32[16,128], index: 2, kind: output, shape index: {}]
  %s3 = sld [smem:[#allocation0]]
  $region22: #{up_conv.1} parent=0
    _
  %s5 = ssub.s32 1, %s3
  %s6 = scalar_select 0, %s5, %s3
  // Predicated region
  $region2: #{up_conv.1} parent=0 // pred_check
    _
  $region3: #{up_conv.1} parent=0 // pred_check_branch
    %8 = sbr.rel (0) target = $region5
  $region4: #{up_conv.1} parent=0 // pred_region
    _
  $region5: #{up_conv.1} parent=0 // pred_fallthru
    _
  // Predicated region
  $region6: #{up_conv.1} parent=0 // pred_check
    _
  $region7: #{up_conv.1} parent=0 // pred_check_branch
    %10 = sbr.rel (0) target = $region9
  $region8: #{up_conv.1} parent=0 // pred_region
    _
  $region9: #{up_conv.1} parent=0 // pred_fallthru
    _
  %v11 = vld [vmem:[%s0] sm:$0xff]
  %v12 = vld [vmem:[%s1] sm:$0xff]
  %v13 = vld [vmem:[%s1 + $0x8] sm:$0xff]
  %v14 = vld [vmem:[%s1 + $0x10] sm:$0xff]
  %v15 = vld [vmem:[%s1 + $0x18] sm:$0xff]
  %v17 = vcombine.high %v11, %v11
  %18 = vrot.lane.b32.xlu0 %v11, 126
  %v19 = vpop.permute.xlu0 %18
  %20 = vrot.lane.b32.xlu0 %v17, 126
  %v21 = vpop.permute.xlu0 %20
  %vm22 = vcmask 1031168
  %v23 = vsel %vm22, %v19, %v21
  %vm24 = vcmask 31744
  %v26 = vsel %vm24, %v14, 0
  %v29 = vsel %vm24, %v15, 0
  %vm31 = vcmask 1043456
  %v32 = vsel %vm31, %v23, 0
  %34 = vmatprep.subr.mxu0 0.0
  %35 = vmatpush1.msra.mxu0 0.0
  %36 = vmatprep.subr.mxu0 0.0
  %37 = vmatpush1.msra.mxu0 0.0
  %38 = vmatprep.subr.mxu0 0.0
  %39 = vmatpush1.msra.mxu0 0.0
  %40 = vmatprep.subr.mxu0 0.0
  %41 = vmatpush1.msra.mxu0 0.0
  %42 = vmatprep.subr.mxu0 0.0
  %43 = vmatpush1.msra.mxu0 0.0
  %44 = vmatprep.subr.mxu0 0.0
  %45 = vmatpush1.msra.mxu0 0.0
  %46 = vmatprep.subr.mxu0 0.0
  %47 = vmatpush1.msra.mxu0 0.0
  %48 = vmatprep.subr.mxu0 0.0
  %49 = vmatpush1.msra.mxu0 0.0
  %50 = vmatprep.subr.mxu0 0.0
  %51 = vmatpush1.msra.mxu0 0.0
  %52 = vmatprep.subr.mxu0 0.0
  %53 = vmatpush1.msra.mxu0 0.0
  %54 = vmatprep.subr.mxu0 0.0
  %55 = vmatpush1.msra.mxu0 0.0
  %56 = vmatprep.subr.mxu0 0.0
  %57 = vmatpush1.msra.mxu0 0.0
  %58 = vmatprep.subr.mxu0 0.0
  %59 = vmatpush1.msra.mxu0 0.0
  %60 = vmatprep.subr.mxu0 0.0
  %61 = vmatpush1.msra.mxu0 0.0
  %62 = vmatprep.subr.mxu0 0.0
  %63 = vmatpush1.msra.mxu0 0.0
  %64 = vmatprep.subr.mxu0 0.0
  %65 = vmatpush1.msra.mxu0 %v32
  %66 = vmatprep.subr.mxu0 0.0
  %67 = vmatpush2.msra.mxu0 0.0
  %68 = vmatprep.subr.mxu0 0.0
  %69 = vmatpush2.msra.mxu0 0.0
  %70 = vmatprep.subr.mxu0 0.0
  %71 = vmatpush2.msra.mxu0 0.0
  %72 = vmatprep.subr.mxu0 0.0
  %73 = vmatpush2.msra.mxu0 0.0
  %74 = vmatprep.subr.mxu0 0.0
  %75 = vmatpush2.msra.mxu0 0.0
  %76 = vmatprep.subr.mxu0 0.0
  %77 = vmatpush2.msra.mxu0 0.0
  %78 = vmatprep.subr.mxu0 0.0
  %79 = vmatpush2.msra.mxu0 0.0
  %80 = vmatprep.subr.mxu0 0.0
  %81 = vmatpush2.msra.mxu0 0.0
  %82 = vmatprep.subr.mxu0 0.0
  %83 = vmatpush2.msra.mxu0 0.0
  %84 = vmatprep.subr.mxu0 0.0
  %85 = vmatpush2.msra.mxu0 0.0
  %86 = vmatprep.subr.mxu0 0.0
  %87 = vmatpush2.msra.mxu0 0.0
  %88 = vmatprep.subr.mxu0 0.0
  %89 = vmatpush2.msra.mxu0 0.0
  %90 = vmatprep.subr.mxu0 0.0
  %91 = vmatpush2.msra.mxu0 0.0
  %92 = vmatprep.subr.mxu0 0.0
  %93 = vmatpush2.msra.mxu0 0.0
  %94 = vmatprep.subr.mxu0 0.0
  %95 = vmatpush2.msra.mxu0 0.0
  %96 = vmatprep.subr.mxu0 0.0
  %97 = vmatpush2.msra.mxu0 0.0
  %98 = vmatprep.mubr.f32.mxu0 0.0
  %99 = vmatmul.mubr.f32.gmra.mxu0 %v26
  %v100 = vpop.f32.mrf.mxu0
  %v101 = vadd.f32 0.0, %v100
  %v102 = vpop.f32.mrf.mxu0
  %103 = vmatprep.mubr.f32.mxu0 0.0
  %104 = vmatmul.mubr.f32.gmra.mxu0 %v29
  %v105 = vpop.f32.mrf.mxu0
  %v106 = vadd.f32 0.0, %v105
  %v107 = vpop.f32.mrf.mxu0
  %108 = vdwg.mxu0
  %v110 = vsel %vm24, %v12, 0
  %v113 = vsel %vm24, %v13, 0
  %v115 = vsel %vm31, %v11, 0
  %117 = vmatprep.subr.mxu0 0.0
  %118 = vmatpush1.msra.mxu0 0.0
  %119 = vmatprep.subr.mxu0 0.0
  %120 = vmatpush1.msra.mxu0 0.0
  %121 = vmatprep.subr.mxu0 0.0
  %122 = vmatpush1.msra.mxu0 0.0
  %123 = vmatprep.subr.mxu0 0.0
  %124 = vmatpush1.msra.mxu0 0.0
  %125 = vmatprep.subr.mxu0 0.0
  %126 = vmatpush1.msra.mxu0 0.0
  %127 = vmatprep.subr.mxu0 0.0
  %128 = vmatpush1.msra.mxu0 0.0
  %129 = vmatprep.subr.mxu0 0.0
  %130 = vmatpush1.msra.mxu0 0.0
  %131 = vmatprep.subr.mxu0 0.0
  %132 = vmatpush1.msra.mxu0 0.0
  %133 = vmatprep.subr.mxu0 0.0
  %134 = vmatpush1.msra.mxu0 0.0
  %135 = vmatprep.subr.mxu0 0.0
  %136 = vmatpush1.msra.mxu0 0.0
  %137 = vmatprep.subr.mxu0 0.0
  %138 = vmatpush1.msra.mxu0 0.0
  %139 = vmatprep.subr.mxu0 0.0
  %140 = vmatpush1.msra.mxu0 0.0
  %141 = vmatprep.subr.mxu0 0.0
  %142 = vmatpush1.msra.mxu0 0.0
  %143 = vmatprep.subr.mxu0 0.0
  %144 = vmatpush1.msra.mxu0 0.0
  %145 = vmatprep.subr.mxu0 0.0
  %146 = vmatpush1.msra.mxu0 0.0
  %147 = vmatprep.subr.mxu0 0.0
  %148 = vmatpush1.msra.mxu0 %v115
  %149 = vmatprep.subr.mxu0 0.0
  %150 = vmatpush2.msra.mxu0 0.0
  %151 = vmatprep.subr.mxu0 0.0
  %152 = vmatpush2.msra.mxu0 0.0
  %153 = vmatprep.subr.mxu0 0.0
  %154 = vmatpush2.msra.mxu0 0.0
  %155 = vmatprep.subr.mxu0 0.0
  %156 = vmatpush2.msra.mxu0 0.0
  %157 = vmatprep.subr.mxu0 0.0
  %158 = vmatpush2.msra.mxu0 0.0
  %159 = vmatprep.subr.mxu0 0.0
  %160 = vmatpush2.msra.mxu0 0.0
  %161 = vmatprep.subr.mxu0 0.0
  %162 = vmatpush2.msra.mxu0 0.0
  %163 = vmatprep.subr.mxu0 0.0
  %164 = vmatpush2.msra.mxu0 0.0
  %165 = vmatprep.subr.mxu0 0.0
  %166 = vmatpush2.msra.mxu0 0.0
  %167 = vmatprep.subr.mxu0 0.0
  %168 = vmatpush2.msra.mxu0 0.0
  %169 = vmatprep.subr.mxu0 0.0
  %170 = vmatpush2.msra.mxu0 0.0
  %171 = vmatprep.subr.mxu0 0.0
  %172 = vmatpush2.msra.mxu0 0.0
  %173 = vmatprep.subr.mxu0 0.0
  %174 = vmatpush2.msra.mxu0 0.0
  %175 = vmatprep.subr.mxu0 0.0
  %176 = vmatpush2.msra.mxu0 0.0
  %177 = vmatprep.subr.mxu0 0.0
  %178 = vmatpush2.msra.mxu0 0.0
  %179 = vmatprep.subr.mxu0 0.0
  %180 = vmatpush2.msra.mxu0 0.0
  %181 = vmatprep.mubr.f32.mxu0 0.0
  %182 = vmatmul.mubr.f32.gmra.mxu0 %v110
  %v183 = vpop.f32.mrf.mxu0
  %v184 = vadd.f32 %v101, %v183
  %v185 = vpop.f32.mrf.mxu0
  %186 = vmatprep.mubr.f32.mxu0 0.0
  %187 = vmatmul.mubr.f32.gmra.mxu0 %v113
  %v188 = vpop.f32.mrf.mxu0
  %v189 = vadd.f32 %v106, %v188
  %v190 = vpop.f32.mrf.mxu0
  %191 = vdwg.mxu0
  %v192 = vld [vmem:[%s1 + $0x20] sm:$0xff]
  %v193 = vld [vmem:[%s1 + $0x28] sm:$0xff]
  %194 = vrot.lane.b32.xlu0 %v11, 124
  %v195 = vpop.permute.xlu0 %194
  %196 = vrot.lane.b32.xlu0 %v17, 124
  %v197 = vpop.permute.xlu0 %196
  %vm198 = vcmask 1014784
  %v199 = vsel %vm198, %v195, %v197
  %v201 = vsel %vm24, %v192, 0
  %v204 = vsel %vm24, %v193, 0
  %v206 = vsel %vm31, %v199, 0
  %208 = vmatprep.subr.mxu0 0.0
  %209 = vmatpush1.msra.mxu0 0.0
  %210 = vmatprep.subr.mxu0 0.0
  %211 = vmatpush1.msra.mxu0 0.0
  %212 = vmatprep.subr.mxu0 0.0
  %213 = vmatpush1.msra.mxu0 0.0
  %214 = vmatprep.subr.mxu0 0.0
  %215 = vmatpush1.msra.mxu0 0.0
  %216 = vmatprep.subr.mxu0 0.0
  %217 = vmatpush1.msra.mxu0 0.0
  %218 = vmatprep.subr.mxu0 0.0
  %219 = vmatpush1.msra.mxu0 0.0
  %220 = vmatprep.subr.mxu0 0.0
  %221 = vmatpush1.msra.mxu0 0.0
  %222 = vmatprep.subr.mxu0 0.0
  %223 = vmatpush1.msra.mxu0 0.0
  %224 = vmatprep.subr.mxu0 0.0
  %225 = vmatpush1.msra.mxu0 0.0
  %226 = vmatprep.subr.mxu0 0.0
  %227 = vmatpush1.msra.mxu0 0.0
  %228 = vmatprep.subr.mxu0 0.0
  %229 = vmatpush1.msra.mxu0 0.0
  %230 = vmatprep.subr.mxu0 0.0
  %231 = vmatpush1.msra.mxu0 0.0
  %232 = vmatprep.subr.mxu0 0.0
  %233 = vmatpush1.msra.mxu0 0.0
  %234 = vmatprep.subr.mxu0 0.0
  %235 = vmatpush1.msra.mxu0 0.0
  %236 = vmatprep.subr.mxu0 0.0
  %237 = vmatpush1.msra.mxu0 0.0
  %238 = vmatprep.subr.mxu0 0.0
  %239 = vmatpush1.msra.mxu0 %v206
  %240 = vmatprep.subr.mxu0 0.0
  %241 = vmatpush2.msra.mxu0 0.0
  %242 = vmatprep.subr.mxu0 0.0
  %243 = vmatpush2.msra.mxu0 0.0
  %244 = vmatprep.subr.mxu0 0.0
  %245 = vmatpush2.msra.mxu0 0.0
  %246 = vmatprep.subr.mxu0 0.0
  %247 = vmatpush2.msra.mxu0 0.0
  %248 = vmatprep.subr.mxu0 0.0
  %249 = vmatpush2.msra.mxu0 0.0
  %250 = vmatprep.subr.mxu0 0.0
  %251 = vmatpush2.msra.mxu0 0.0
  %252 = vmatprep.subr.mxu0 0.0
  %253 = vmatpush2.msra.mxu0 0.0
  %254 = vmatprep.subr.mxu0 0.0
  %255 = vmatpush2.msra.mxu0 0.0
  %256 = vmatprep.subr.mxu0 0.0
  %257 = vmatpush2.msra.mxu0 0.0
  %258 = vmatprep.subr.mxu0 0.0
  %259 = vmatpush2.msra.mxu0 0.0
  %260 = vmatprep.subr.mxu0 0.0
  %261 = vmatpush2.msra.mxu0 0.0
  %262 = vmatprep.subr.mxu0 0.0
  %263 = vmatpush2.msra.mxu0 0.0
  %264 = vmatprep.subr.mxu0 0.0
  %265 = vmatpush2.msra.mxu0 0.0
  %266 = vmatprep.subr.mxu0 0.0
  %267 = vmatpush2.msra.mxu0 0.0
  %268 = vmatprep.subr.mxu0 0.0
  %269 = vmatpush2.msra.mxu0 0.0
  %270 = vmatprep.subr.mxu0 0.0
  %271 = vmatpush2.msra.mxu0 0.0
  %272 = vmatprep.mubr.f32.mxu0 0.0
  %273 = vmatmul.mubr.f32.gmra.mxu0 %v201
  %v274 = vpop.f32.mrf.mxu0
  %v275 = vadd.f32 0.0, %v274
  %v276 = vpop.f32.mrf.mxu0
  %277 = vmatprep.mubr.f32.mxu0 0.0
  %278 = vmatmul.mubr.f32.gmra.mxu0 %v204
  %v279 = vpop.f32.mrf.mxu0
  %v280 = vadd.f32 0.0, %v279
  %v281 = vpop.f32.mrf.mxu0
  %282 = vdwg.mxu0
  %v283 = vadd.f32 %v184, %v275
  %v284 = vadd.f32 %v189, %v280
  %285 = vst [vmem:[%s2] sm:$0xff] %v283
  %286 = vst [vmem:[%s2 + $0x8] sm:$0xff] %v284
  %p287 = scmp.eq.s32.totalorder 0, 0
  // Predicated region
  $region10: #{up_conv.1} parent=0 // pred_check
    %p288 = pneg %p287
  $region11: #{up_conv.1} parent=0 // pred_check_branch
    %290 = sbr.rel (%p288) target = $region13
  $region12: #{up_conv.1} parent=0 // pred_region
    %291 = vrot.lane.b32.xlu0 %v11, 2
    %v292 = vpop.permute.xlu0 %291
    %v294 = vsub.f32 %v11, %v292
    %v295 = vld [vmem:[%s1 + $0x30] sm:$0xff]
    %297 = vrot.lane.b32.xlu0 %v294, 124
    %v298 = vpop.permute.xlu0 %297
    %v300 = vsel %vm24, %v295, 0
    %v302 = vsel %vm31, %v298, 0
    %304 = vmatprep.subr.mxu0 0.0
    %305 = vmatpush1.msra.mxu0 0.0
    %306 = vmatprep.subr.mxu0 0.0
    %307 = vmatpush1.msra.mxu0 0.0
    %308 = vmatprep.subr.mxu0 0.0
    %309 = vmatpush1.msra.mxu0 0.0
    %310 = vmatprep.subr.mxu0 0.0
    %311 = vmatpush1.msra.mxu0 0.0
    %312 = vmatprep.subr.mxu0 0.0
    %313 = vmatpush1.msra.mxu0 0.0
    %314 = vmatprep.subr.mxu0 0.0
    %315 = vmatpush1.msra.mxu0 0.0
    %316 = vmatprep.subr.mxu0 0.0
    %317 = vmatpush1.msra.mxu0 0.0
    %318 = vmatprep.subr.mxu0 0.0
    %319 = vmatpush1.msra.mxu0 0.0
    %320 = vmatprep.subr.mxu0 0.0
    %321 = vmatpush1.msra.mxu0 0.0
    %322 = vmatprep.subr.mxu0 0.0
    %323 = vmatpush1.msra.mxu0 0.0
    %324 = vmatprep.subr.mxu0 0.0
    %325 = vmatpush1.msra.mxu0 0.0
    %326 = vmatprep.subr.mxu0 0.0
    %327 = vmatpush1.msra.mxu0 0.0
    %328 = vmatprep.subr.mxu0 0.0
    %329 = vmatpush1.msra.mxu0 0.0
    %330 = vmatprep.subr.mxu0 0.0
    %331 = vmatpush1.msra.mxu0 0.0
    %332 = vmatprep.subr.mxu0 0.0
    %333 = vmatpush1.msra.mxu0 0.0
    %334 = vmatprep.subr.mxu0 0.0
    %335 = vmatpush1.msra.mxu0 %v302
    %336 = vmatprep.subr.mxu0 0.0
    %337 = vmatpush2.msra.mxu0 0.0
    %338 = vmatprep.subr.mxu0 0.0
    %339 = vmatpush2.msra.mxu0 0.0
    %340 = vmatprep.subr.mxu0 0.0
    %341 = vmatpush2.msra.mxu0 0.0
    %342 = vmatprep.subr.mxu0 0.0
    %343 = vmatpush2.msra.mxu0 0.0
    %344 = vmatprep.subr.mxu0 0.0
    %345 = vmatpush2.msra.mxu0 0.0
    %346 = vmatprep.subr.mxu0 0.0
    %347 = vmatpush2.msra.mxu0 0.0
    %348 = vmatprep.subr.mxu0 0.0
    %349 = vmatpush2.msra.mxu0 0.0
    %350 = vmatprep.subr.mxu0 0.0
    %351 = vmatpush2.msra.mxu0 0.0
    %352 = vmatprep.subr.mxu0 0.0
    %353 = vmatpush2.msra.mxu0 0.0
    %354 = vmatprep.subr.mxu0 0.0
    %355 = vmatpush2.msra.mxu0 0.0
    %356 = vmatprep.subr.mxu0 0.0
    %357 = vmatpush2.msra.mxu0 0.0
    %358 = vmatprep.subr.mxu0 0.0
    %359 = vmatpush2.msra.mxu0 0.0
    %360 = vmatprep.subr.mxu0 0.0
    %361 = vmatpush2.msra.mxu0 0.0
    %362 = vmatprep.subr.mxu0 0.0
    %363 = vmatpush2.msra.mxu0 0.0
    %364 = vmatprep.subr.mxu0 0.0
    %365 = vmatpush2.msra.mxu0 0.0
    %366 = vmatprep.subr.mxu0 0.0
    %367 = vmatpush2.msra.mxu0 0.0
    %368 = vmatprep.mubr.f32.mxu0 0.0
    %369 = vmatmul.mubr.f32.gmra.mxu0 %v300
    %v370 = vpop.f32.mrf.mxu0
    %v371 = vadd.f32 0.0, %v370
    %v372 = vpop.f32.mrf.mxu0
    %373 = vdwg.mxu0
    %v374 = vld [vmem:[%s2] sm:$0xff]
    %v375 = vadd.f32 %v374, %v371
    %vm376 = vcmask 15360
    %377 = vst.msk [vmem:[%s2] sm:$0xff] %vm376, %v375
    %v379 = vsub.f32 %v11, %v19
    %v380 = vld [vmem:[%s1 + $0x38] sm:$0xff]
    %382 = vrot.lane.b32.xlu0 %v379, 98
    %v383 = vpop.permute.xlu0 %382
    %v385 = vsel %vm24, %v380, 0
    %v387 = vsel %vm31, %v383, 0
    %389 = vmatprep.subr.mxu0 0.0
    %390 = vmatpush1.msra.mxu0 0.0
    %391 = vmatprep.subr.mxu0 0.0
    %392 = vmatpush1.msra.mxu0 0.0
    %393 = vmatprep.subr.mxu0 0.0
    %394 = vmatpush1.msra.mxu0 0.0
    %395 = vmatprep.subr.mxu0 0.0
    %396 = vmatpush1.msra.mxu0 0.0
    %397 = vmatprep.subr.mxu0 0.0
    %398 = vmatpush1.msra.mxu0 0.0
    %399 = vmatprep.subr.mxu0 0.0
    %400 = vmatpush1.msra.mxu0 0.0
    %401 = vmatprep.subr.mxu0 0.0
    %402 = vmatpush1.msra.mxu0 0.0
    %403 = vmatprep.subr.mxu0 0.0
    %404 = vmatpush1.msra.mxu0 0.0
    %405 = vmatprep.subr.mxu0 0.0
    %406 = vmatpush1.msra.mxu0 0.0
    %407 = vmatprep.subr.mxu0 0.0
    %408 = vmatpush1.msra.mxu0 0.0
    %409 = vmatprep.subr.mxu0 0.0
    %410 = vmatpush1.msra.mxu0 0.0
    %411 = vmatprep.subr.mxu0 0.0
    %412 = vmatpush1.msra.mxu0 0.0
    %413 = vmatprep.subr.mxu0 0.0
    %414 = vmatpush1.msra.mxu0 0.0
    %415 = vmatprep.subr.mxu0 0.0
    %416 = vmatpush1.msra.mxu0 0.0
    %417 = vmatprep.subr.mxu0 0.0
    %418 = vmatpush1.msra.mxu0 0.0
    %419 = vmatprep.subr.mxu0 0.0
    %420 = vmatpush1.msra.mxu0 %v387
    %421 = vmatprep.subr.mxu0 0.0
    %422 = vmatpush2.msra.mxu0 0.0
    %423 = vmatprep.subr.mxu0 0.0
    %424 = vmatpush2.msra.mxu0 0.0
    %425 = vmatprep.subr.mxu0 0.0
    %426 = vmatpush2.msra.mxu0 0.0
    %427 = vmatprep.subr.mxu0 0.0
    %428 = vmatpush2.msra.mxu0 0.0
    %429 = vmatprep.subr.mxu0 0.0
    %430 = vmatpush2.msra.mxu0 0.0
    %431 = vmatprep.subr.mxu0 0.0
    %432 = vmatpush2.msra.mxu0 0.0
    %433 = vmatprep.subr.mxu0 0.0
    %434 = vmatpush2.msra.mxu0 0.0
    %435 = vmatprep.subr.mxu0 0.0
    %436 = vmatpush2.msra.mxu0 0.0
    %437 = vmatprep.subr.mxu0 0.0
    %438 = vmatpush2.msra.mxu0 0.0
    %439 = vmatprep.subr.mxu0 0.0
    %440 = vmatpush2.msra.mxu0 0.0
    %441 = vmatprep.subr.mxu0 0.0
    %442 = vmatpush2.msra.mxu0 0.0
    %443 = vmatprep.subr.mxu0 0.0
    %444 = vmatpush2.msra.mxu0 0.0
    %445 = vmatprep.subr.mxu0 0.0
    %446 = vmatpush2.msra.mxu0 0.0
    %447 = vmatprep.subr.mxu0 0.0
    %448 = vmatpush2.msra.mxu0 0.0
    %449 = vmatprep.subr.mxu0 0.0
    %450 = vmatpush2.msra.mxu0 0.0
    %451 = vmatprep.subr.mxu0 0.0
    %452 = vmatpush2.msra.mxu0 0.0
    %453 = vmatprep.mubr.f32.mxu0 0.0
    %454 = vmatmul.mubr.f32.gmra.mxu0 %v385
    %v455 = vpop.f32.mrf.mxu0
    %v456 = vadd.f32 0.0, %v455
    %v457 = vpop.f32.mrf.mxu0
    %458 = vdwg.mxu0
    %v459 = vld [vmem:[%s2 + $0x8] sm:$0xff]
    %461 = vrot.lane.b32.xlu0 %v456, 30
    %v462 = vpop.permute.xlu0 %461
    %v464 = vadd.f32 %v459, %v462
    %vm465 = vcmask 261360
    %466 = vst.msk [vmem:[%s2 + $0x8] sm:$0xff] %vm465, %v464
  $region13: #{up_conv.1} parent=0 // pred_fallthru
    _
  // Predicated region
  $region14: #{up_conv.1} parent=0 // pred_check
    _
  $region15: #{up_conv.1} parent=0 // pred_check_branch
    %468 = sbr.rel (0) target = $region17
  $region16: #{up_conv.1} parent=0 // pred_region
    _
  $region17: #{up_conv.1} parent=0 // pred_fallthru
    _
  // Predicated region
  $region18: #{up_conv.1} parent=0 // pred_check
    _
  $region19: #{up_conv.1} parent=0 // pred_check_branch
    %470 = sbr.rel (0) target = $region21
  $region20: #{up_conv.1} parent=0 // pred_region
    _
  $region21: #{up_conv.1} parent=0 // pred_fallthru
    _

</llo_original>
